<compile_context>
chip_gen: v7x
topology: tpu7x:2x2x1
jax: 0.10.0
libtpu: 0.0.40
codegen_flags: <defaults>
</compile_context>

<pallas_src>
import jax
import jax.numpy as jnp
from jax.experimental import pallas as pl
from jax.experimental.pallas import tpu as pltpu


def _round_up(x: int, m: int) -> int:
    return ((x + m - 1) // m) * m


def _cdiv(a: int, b: int) -> int:
    return -(-a // b)


# --------------------------------------------------------------------------
# Pass 1: per-feature sum-of-squares of h = z @ w1 (batch-tile grid).
# Accumulates into an (8, H) partial buffer (VPU adds only); the final 8->1
# sublane reduce and the mean happen in the wrapper.
# --------------------------------------------------------------------------
def _bn_sumsq_kernel(z_ref, w1_ref, ssq_ref):
    @pl.when(pl.program_id(0) == 0)
    def _():
        ssq_ref[...] = jnp.zeros_like(ssq_ref)

    # bf16 MXU matmul, f32 accumulation.
    h = jnp.dot(z_ref[...].astype(jnp.bfloat16), w1_ref[...],
                preferred_element_type=jnp.float32)          # (tb, H)
    h2 = h * h
    # (tb, H) -> (tb//8, 8, H): sublane-split reshape (free), reduce over the
    # leading axis with plain vector adds (no XLU cross-sublane reduction).
    ssq_ref[...] += jnp.sum(h2.reshape(-1, 8, h2.shape[-1]), axis=0)


# --------------------------------------------------------------------------
# Pass 2: h = z @ w1 -> fused BN affine -> ReLU -> @ w2 + b2 -> sigmoid.
# One full-width (tb, n_out) output block per batch tile; all weights resident.
# --------------------------------------------------------------------------
def _decoder_kernel(z_ref, w1_ref, scale_ref, shift_ref, w2_ref, b2_ref, out_ref):
    h = jnp.dot(z_ref[...].astype(jnp.bfloat16), w1_ref[...],
                preferred_element_type=jnp.float32)          # (tb, H) f32
    h = h * scale_ref[...] + shift_ref[...]                  # fused BN affine
    h = jnp.maximum(h, 0.0)                                  # ReLU (Dropout p=0 = id)
    logits = jnp.dot(h.astype(jnp.bfloat16), w2_ref[...],
                     preferred_element_type=jnp.float32) + b2_ref[...]
    # sigmoid = 1 / (1 + exp(-x)); exp and approximate reciprocal both run on
    # the EUP slot, keeping the epilogue off the VPU critical path.
    out_ref[...] = pl.reciprocal(1.0 + jnp.exp(-logits), approx=True).astype(out_ref.dtype)


# --------------------------------------------------------------------------
# Parameters (PyTorch nn.Linear-style init, BatchNorm affine params).
# --------------------------------------------------------------------------
def init_decoder_params(key, n_input, n_hidden, n_output):
    k1, k2, k3, k4 = jax.random.split(key, 4)
    lim1 = 1.0 / jnp.sqrt(n_input)
    lim2 = 1.0 / jnp.sqrt(n_hidden)
    return {
        # FCLayers linear (n_input -> n_hidden), stored as (in, out)
        "w1": jax.random.uniform(k1, (n_input, n_hidden), jnp.float32, -lim1, lim1),
        # NOTE: b1 is kept for fidelity with the PyTorch module but has no
        # effect on the forward output under train-mode BatchNorm (it cancels
        # out of (h - mean) and does not change the variance).
        "b1": jax.random.uniform(k2, (1, n_hidden), jnp.float32, -lim1, lim1),
        # BatchNorm1d affine params
        "gamma": jnp.ones((1, n_hidden), jnp.float32),
        "beta": jnp.zeros((1, n_hidden), jnp.float32),
        # px_rho_decoder linear (n_hidden -> n_output)
        "w2": jax.random.uniform(k3, (n_hidden, n_output), jnp.float32, -lim2, lim2),
        "b2": jax.random.uniform(k4, (1, n_output), jnp.float32, -lim2, lim2),
    }


# --------------------------------------------------------------------------
# Wrapper.
# --------------------------------------------------------------------------
def decoder_velovi_forward(z, params, latent_dim=None, *, tb=1024,
                           out_dtype=jnp.float32):
    """Pallas implementation of DecoderVELOVI.forward (linear_decoder=False).

    tb: requested batch tile (rows); balanced and VMEM-capped automatically.
    out_dtype: jnp.float32 (default, faithful) or jnp.bfloat16 (halves the
    dominant output HBM writeback; sigmoid outputs are in [0, 1]).
    """
    # TODO(synk): PyTorch train-mode BatchNorm1d also updates running_mean /
    # running_var buffers (momentum=0.01) as a side effect; that is not part
    # of the returned tensor and is not reproduced here (eval-mode BN, the
    # covariate/one-hot path and linear_decoder=True are likewise out of scope).
    z = z.astype(jnp.float32)
    B, n_in = z.shape
    H = params["w1"].shape[1]
    n_out = params["w2"].shape[1]

    w1 = params["w1"]
    if latent_dim is not None:
        # z @ (w1 * rowmask) == (z * colmask) @ w1 : mask the tiny weight
        # matrix instead of the (B, n_in) activation -> no extra z-sized
        # HBM round trip, static shapes.
        row_mask = (jnp.arange(n_in) == latent_dim).astype(w1.dtype)[:, None]
        w1 = w1 * row_mask

    # One-time bf16 casts of the (small) weights; activations are cast
    # in-register inside the kernels.
    w1_bf = w1.astype(jnp.bfloat16)
    w2_bf = params["w2"].astype(jnp.bfloat16)
    b2 = params["b2"].astype(jnp.float32).reshape(1, n_out)

    # ---- balanced batch tiling with a VMEM budget (no column padding) ------
    out_isz = jnp.dtype(out_dtype).itemsize
    resident = n_in * H * 2 + H * n_out * 2 + n_out * 4 + 2 * H * 4  # w1,w2,b2,scale/shift
    per_row = 2 * (n_out * out_isz + n_in * 4)                        # out + z double-buffers
    budget = 30 * 1024 * 1024                                         # fits v7x's 64 MiB VMEM
    tb_cap = max(8, ((max(budget - resident, per_row * 8)) // per_row) // 8 * 8)
    # TODO(synk): if n_out is so large that the resident w2 alone overflows
    # VMEM, an output-feature-tiled fallback would be needed (not implemented).

    tb = max(8, (tb // 8) * 8)
    B8 = _round_up(B, 8)
    tb_req = min(tb, tb_cap, B8)
    nb = _cdiv(B8, tb_req)
    tb_eff = _round_up(_cdiv(B8, nb), 8)   # balanced: padding waste < nb*8 rows
    B_pad = nb * tb_eff

    z_p = z if B_pad == B else jnp.pad(z, ((0, B_pad - B), (0, 0)))

    vmem_limit = 40 * 1024 * 1024  # > tile budget; safe on v5e/v6e/v7x

    # ---- pass 1: BatchNorm batch sum-of-squares ----------------------------
    # (Megacore split of this tiny pass on v7x is intentionally skipped; its
    # cost is already reduced by moving the mean to the wrapper.)
    sumsq_part = pl.pallas_call(
        _bn_sumsq_kernel,
        grid=(nb,),
        out_shape=jax.ShapeDtypeStruct((8, H), jnp.float32),
        in_specs=[
            pl.BlockSpec((tb_eff, n_in), lambda i: (i, 0)),
            pl.BlockSpec((n_in, H), lambda i: (0, 0)),
        ],
        out_specs=pl.BlockSpec((8, H), lambda i: (0, 0)),
        compiler_params=pltpu.CompilerParams(
            dimension_semantics=("arbitrary",),
            vmem_limit_bytes=vmem_limit,
        ),
    )(z_p, w1_bf)

    # Tiny (1, H) fold in plain JAX.  Mean via sum_b(z @ w1) == (sum_b z) @ w1
    # (f32, exact); padded zero rows contribute 0 to the sumsq accumulator
    # (b1 dropped), so we divide by the true batch size.  Biased var, eps=1e-3.
    inv_b = 1.0 / B
    mean = (jnp.sum(z, axis=0, keepdims=True) @ w1) * inv_b
    sumsq = jnp.sum(sumsq_part, axis=0, keepdims=True)
    var = jnp.maximum(sumsq * inv_b - mean * mean, 0.0)
    rstd = jax.lax.rsqrt(var + 1e-3)
    scale = params["gamma"].reshape(1, H).astype(jnp.float32) * rstd
    shift = params["beta"].reshape(1, H).astype(jnp.float32) - mean * scale

    # ---- pass 2: BN affine + ReLU + second matmul + sigmoid ----------------
    out = pl.pallas_call(
        _decoder_kernel,
        grid=(nb,),
        out_shape=jax.ShapeDtypeStruct((B_pad, n_out), out_dtype),
        in_specs=[
            pl.BlockSpec((tb_eff, n_in), lambda i: (i, 0)),   # z tile (double-buffered)
            pl.BlockSpec((n_in, H), lambda i: (0, 0)),        # w1 (VMEM-resident)
            pl.BlockSpec((1, H), lambda i: (0, 0)),           # scale (resident)
            pl.BlockSpec((1, H), lambda i: (0, 0)),           # shift (resident)
            pl.BlockSpec((H, n_out), lambda i: (0, 0)),       # w2 full-width (resident)
            pl.BlockSpec((1, n_out), lambda i: (0, 0)),       # b2 full-width (resident)
        ],
        out_specs=pl.BlockSpec((tb_eff, n_out), lambda i: (i, 0)),  # full-width output block
        compiler_params=pltpu.CompilerParams(
            dimension_semantics=("parallel",),
            vmem_limit_bytes=vmem_limit,
        ),
    )(z_p, w1_bf, scale, shift, w2_bf, b2)

    if B_pad == B:
        return out              # identity: no post-kernel slice copy
    return out[:B]              # near-identity row slice (padding < nb*8 rows)


# --------------------------------------------------------------------------
# References for correctness checking.
# --------------------------------------------------------------------------
def _reference_forward_mirror(z, params, latent_dim=None):
    """Pure-JAX reference mirroring the kernel numerics (bf16 matmul inputs,
    f32 accumulation, E[x^2]-E[x]^2 variance, f32 mean via (sum z) @ w1,
    b1 dropped).  The kernel's approx-reciprocal sigmoid is the only
    structural difference -> compared at ~1e-2 tolerance."""
    z = z.astype(jnp.float32)
    n_in = z.shape[1]
    B = z.shape[0]
    w1 = params["w1"]
    if latent_dim is not None:
        row_mask = (jnp.arange(n_in) == latent_dim).astype(w1.dtype)[:, None]
        w1 = w1 * row_mask
    h = jnp.dot(z.astype(jnp.bfloat16), w1.astype(jnp.bfloat16),
                preferred_element_type=jnp.float32)
    mean = (jnp.sum(z, axis=0, keepdims=True) @ w1) / B
    var = jnp.maximum(jnp.mean(h * h, axis=0, keepdims=True) - mean * mean, 0.0)
    rstd = jax.lax.rsqrt(var + 1e-3)
    scale = params["gamma"] * rstd
    shift = params["beta"] - mean * scale
    hn = jnp.maximum(h * scale + shift, 0.0).astype(jnp.bfloat16)
    logits = jnp.dot(hn, params["w2"].astype(jnp.bfloat16),
                     preferred_element_type=jnp.float32) + params["b2"]
    return jax.nn.sigmoid(logits)


def _reference_forward_pytorch(z, params, latent_dim=None):
    """f32 reference matching the PyTorch module literally (b1 kept,
    two-pass biased batch variance, train-mode BN)."""
    z = z.astype(jnp.float32)
    if latent_dim is not None:
        mask = jnp.zeros_like(z).at[..., latent_dim].set(1.0)
        z = z * mask
    h = z @ params["w1"] + params["b1"]
    mean = jnp.mean(h, axis=0, keepdims=True)
    var = jnp.mean((h - mean) ** 2, axis=0, keepdims=True)
    h = (h - mean) / jnp.sqrt(var + 1e-3) * params["gamma"] + params["beta"]
    h = jnp.maximum(h, 0.0)
    return jax.nn.sigmoid(h @ params["w2"] + params["b2"])


if __name__ == "__main__":
    key = jax.random.PRNGKey(0)
    k_z, k_p = jax.random.split(key)

    batch = 24       # n_samples (multiple of 8 -> default path has zero padding)
    n_input = 16     # latent dimensionality
    n_hidden = 128   # FCLayers hidden size (module default)
    n_output = 200   # data-space (gene) dimensionality (no column padding)

    z = jax.random.normal(k_z, (batch, n_input), jnp.float32)
    params = init_decoder_params(k_p, n_input, n_hidden, n_output)

    mirror = _reference_forward_mirror(z, params)
    faithful = _reference_forward_pytorch(z, params)

    # Default path: balanced tiling gives a single 24-row tile, B_pad == B,
    # so the output is returned with no post-kernel slice copy.
    px = jax.block_until_ready(decoder_velovi_forward(z, params))
    assert px.shape == (batch, n_output)
    assert jnp.allclose(px, mirror, atol=1e-2, rtol=1e-2), "mismatch vs bf16 mirror"
    assert jnp.allclose(px, faithful, atol=3e-2, rtol=3e-2), "mismatch vs f32 reference"

    # Small requested tile: exercises a real 2-batch-tile grid with row padding
    # (B_pad = 32 > 24) and the near-identity row slice.
    px_t = jax.block_until_ready(decoder_velovi_forward(z, params, tb=16))
    assert px_t.shape == (batch, n_output)
    assert jnp.allclose(px_t, mirror, atol=1e-2, rtol=1e-2)

    # latent_dim masking path.
    px_m = jax.block_until_ready(
        decoder_velovi_forward(z, params, latent_dim=3, tb=16))
    assert jnp.allclose(px_m, _reference_forward_mirror(z, params, latent_dim=3),
                        atol=1e-2, rtol=1e-2)
    assert jnp.allclose(px_m, _reference_forward_pytorch(z, params, latent_dim=3),
                        atol=3e-2, rtol=3e-2)

    # bf16 output option (halves the dominant HBM writeback traffic).
    px_b = jax.block_until_ready(
        decoder_velovi_forward(z, params, out_dtype=jnp.bfloat16))
    assert px_b.dtype == jnp.bfloat16
    assert jnp.allclose(px_b.astype(jnp.float32), mirror, atol=2e-2, rtol=2e-2)

    print("KERNEL_OK")
</pallas_src>

<mosaic_0001>
module attributes {stable_mosaic.version = 11 : i64} {
  func.func @_bn_sumsq_kernel(%arg0: i32, %arg1: memref<24x16xf32, #tpu.memory_space<vmem>>, %arg2: memref<16x128xbf16, #tpu.memory_space<vmem>>, %arg3: memref<8x128xf32, #tpu.memory_space<vmem>>) attributes {dimension_semantics = [#tpu.dimension_semantics<arbitrary>], iteration_bounds = array<i64: 1>, scalar_prefetch = 0 : i64, scratch_operands = 0 : i64, tpu.core_type = #tpu.core_type<tc>, window_params = [{transform_indices = @transform_0, window_bounds = array<i64: 24, 16>}, {pipeline_mode = #tpu.pipeline_mode<synchronous>, transform_indices = @transform_1, window_bounds = array<i64: 16, 128>}, {pipeline_mode = #tpu.pipeline_mode<synchronous>, transform_indices = @transform_2, window_bounds = array<i64: 8, 128>}]} {
    %c0_i32 = arith.constant 0 : i32
    %0 = arith.cmpi eq, %arg0, %c0_i32 : i32
    %1 = arith.extui %0 : i1 to i32
    %c0_i32_0 = arith.constant 0 : i32
    %2 = arith.cmpi ne, %1, %c0_i32_0 : i32
    scf.if %2 {
      %cst_9 = arith.constant 0.000000e+00 : f32
      %13 = vector.broadcast %cst_9 : f32 to vector<8x128xf32>
      %c0_10 = arith.constant 0 : index
      %c0_11 = arith.constant 0 : index
      %14 = vector.load %arg3[%c0_10, %c0_11] : memref<8x128xf32, #tpu.memory_space<vmem>>, vector<8x128xf32>
      tpu.vector_store %arg3[%c0_10, %c0_11], %13 {strides = array<i32>} : memref<8x128xf32, #tpu.memory_space<vmem>>, vector<8x128xf32>,
    } else {
    }
    %c0 = arith.constant 0 : index
    %c0_1 = arith.constant 0 : index
    %3 = vector.load %arg1[%c0, %c0_1] : memref<24x16xf32, #tpu.memory_space<vmem>>, vector<24x16xf32>
    %4 = arith.truncf %3 : vector<24x16xf32> to vector<24x16xbf16>
    %c0_2 = arith.constant 0 : index
    %c0_3 = arith.constant 0 : index
    %5 = vector.load %arg2[%c0_2, %c0_3] : memref<16x128xbf16, #tpu.memory_space<vmem>>, vector<16x128xbf16>
    %cst = arith.constant dense<0.000000e+00> : vector<24x128xf32>
    %6 = tpu.matmul %4, %5, %cst {dimension_numbers = #tpu.dot_dimension_numbers<[1], [0], [0], [1], [0, 0, 1, 1], [], []>} : vector<24x16xbf16>, vector<16x128xbf16>, vector<24x128xf32> -> vector<24x128xf32>
    %7 = arith.mulf %6, %6 : vector<24x128xf32>
    %c0_4 = arith.constant 0 : index
    %c0_5 = arith.constant 0 : index
    %8 = vector.load %arg3[%c0_4, %c0_5] : memref<8x128xf32, #tpu.memory_space<vmem>>, vector<8x128xf32>
    %9 = vector.shape_cast %7 : vector<24x128xf32> to vector<3x8x128xf32>
    %cst_6 = arith.constant dense<0.000000e+00> : vector<8x128xf32>
    %10 = vector.multi_reduction <add>, %9, %cst_6 [0] : vector<3x8x128xf32> to vector<8x128xf32>
    %11 = arith.addf %8, %10 : vector<8x128xf32>
    %c0_7 = arith.constant 0 : index
    %c0_8 = arith.constant 0 : index
    %12 = vector.load %arg3[%c0_7, %c0_8] : memref<8x128xf32, #tpu.memory_space<vmem>>, vector<8x128xf32>
    tpu.vector_store %arg3[%c0_7, %c0_8], %11 {strides = array<i32>} : memref<8x128xf32, #tpu.memory_space<vmem>>, vector<8x128xf32>,
    return
  }
  func.func @transform_0(%arg0: i32) -> (i32, i32) {
    %c0_i32 = arith.constant 0 : i32
    %c0_i32_0 = arith.constant 0 : i32
    return %arg0, %c0_i32 : i32, i32
  }
  func.func @transform_1(%arg0: i32) -> (i32, i32) {
    %c0_i32 = arith.constant 0 : i32
    %c0_i32_0 = arith.constant 0 : i32
    %c0_i32_1 = arith.constant 0 : i32
    return %c0_i32, %c0_i32_0 : i32, i32
  }
  func.func @transform_2(%arg0: i32) -> (i32, i32) {
    %c0_i32 = arith.constant 0 : i32
    %c0_i32_0 = arith.constant 0 : i32
    %c0_i32_1 = arith.constant 0 : i32
    return %c0_i32, %c0_i32_0 : i32, i32
  }
}

</mosaic_0001>

<llo_original>
// kernel: tpu_custom_call.1
$region0: #{tpu_custom_call.1}
  #allocation0 [shape = 'u32[]', space=smem, size = 0x4, offset = 0x4, fixed_abs, tag = 'smem constant byte address 0x4 - core index']
  #allocation1 [shape = 'u32[144,128]{1,0:T(1,128)}', space=vmem, size = 0x12000, scoped, tag = 'internal scratch']
  %s0 = inlined_call_operand.vmem [shape: f32[24,16], index: 0, kind: input, shape index: {}]
  %s1 = inlined_call_operand.vmem [shape: bf16[16,128], index: 1, kind: input, shape index: {}]
  %s2 = inlined_call_operand.hbm [shape: f32[8,128], index: 2, kind: output, shape index: {}]
  %s3 = sld [smem:[#allocation0]]
  $region22: #{tpu_custom_call.1} parent=0
    _
  %s5 = ssub.s32 1, %s3
  %s6 = scalar_select 0, %s5, %s3
  $region1: #{tpu_custom_call.1} parent=0
    #allocation2 [shape = 'u8[4096]{0}', space=vmem, size = 0x1000, scoped, tag = 'output window, operand 0, single buffered']
    #allocation3 [shape = 's32[1]{0}', space=sflag, size = 0x4, scoped, tag = 'scoped memory for tpu_custom_call.1']
    %7 = vsyncpa [#allocation3], 0
    // Predicated region
    $region2: #{tpu_custom_call.1} parent=1 // pred_check
      _
    $region3: #{tpu_custom_call.1} parent=1 // pred_check_branch
      %9 = sbr.rel (0) target = $region5
    $region4: #{tpu_custom_call.1} parent=1 // pred_region
      _
    $region5: #{tpu_custom_call.1} parent=1 // pred_fallthru
      _
    // Predicated region
    $region6: #{tpu_custom_call.1} parent=1 // pred_check
      _
    $region7: #{tpu_custom_call.1} parent=1 // pred_check_branch
      %11 = sbr.rel (0) target = $region9
    $region8: #{tpu_custom_call.1} parent=1 // pred_region
      _
    $region9: #{tpu_custom_call.1} parent=1 // pred_fallthru
      _
    %p13 = scmp.eq.s32.totalorder 0, 0
    // Predicated region
    $region10: #{tpu_custom_call.1} parent=1 // pred_check
      %p14 = pneg %p13
    $region11: #{tpu_custom_call.1} parent=1 // pred_check_branch
      %16 = sbr.rel (%p14) target = $region13
    $region12: #{tpu_custom_call.1} parent=1 // pred_region
      %17 = vst [vmem:[#allocation2] sm:$0xff] 0.0
    $region13: #{tpu_custom_call.1} parent=1 // pred_fallthru
      _
    %v18 = vld [vmem:[%s0] sm:$0xff]
    %v19 = vld [vmem:[%s0 + $0x8] sm:$0xff]
    %v20 = vld [vmem:[%s0 + $0x10] sm:$0xff]
    %v21 = vpack.c.bf16 %v19, %v18
    %v22 = vpack.c.bf16 %v20, %v20
    %v23 = vld [vmem:[%s1] sm:$0xf]
    %v24 = vld [vmem:[%s1 + $0x4] sm:$0xf]
    %v27 = vunpack.c.l.b16 %v23
    %v28 = vunpack.c.l.b16 %v24
    %v29 = vpack.c.b16 %v28, %v27
    %vm31 = vcmask 130048
    %v33 = vsel %vm31, %v21, 0
    %v36 = vsel %vm31, %v22, 0
    %38 = vmatprep.subr.bf16.mxu0 0
    %39 = vmatpush1.bf16.msra.mxu0 %v29
    %40 = vmatprep.subr.bf16.mxu0 0
    %41 = vmatpush1.bf16.msra.mxu0 0
    %42 = vmatprep.subr.bf16.mxu0 0
    %43 = vmatpush1.bf16.msra.mxu0 0
    %44 = vmatprep.subr.bf16.mxu0 0
    %45 = vmatpush1.bf16.msra.mxu0 0
    %46 = vmatprep.subr.bf16.mxu0 0
    %47 = vmatpush1.bf16.msra.mxu0 0
    %48 = vmatprep.subr.bf16.mxu0 0
    %49 = vmatpush1.bf16.msra.mxu0 0
    %50 = vmatprep.subr.bf16.mxu0 0
    %51 = vmatpush1.bf16.msra.mxu0 0
    %52 = vmatprep.subr.bf16.mxu0 0
    %53 = vmatpush1.bf16.msra.mxu0 0
    %54 = vmatprep.subr.bf16.mxu0 0
    %55 = vmatpush1.bf16.msra.mxu0 0
    %56 = vmatprep.subr.bf16.mxu0 0
    %57 = vmatpush1.bf16.msra.mxu0 0
    %58 = vmatprep.subr.bf16.mxu0 0
    %59 = vmatpush1.bf16.msra.mxu0 0
    %60 = vmatprep.subr.bf16.mxu0 0
    %61 = vmatpush1.bf16.msra.mxu0 0
    %62 = vmatprep.subr.bf16.mxu0 0
    %63 = vmatpush1.bf16.msra.mxu0 0
    %64 = vmatprep.subr.bf16.mxu0 0
    %65 = vmatpush1.bf16.msra.mxu0 0
    %66 = vmatprep.subr.bf16.mxu0 0
    %67 = vmatpush1.bf16.msra.mxu0 0
    %68 = vmatprep.subr.bf16.mxu0 0
    %69 = vmatpush1.bf16.msra.mxu0 0
    %70 = vmatprep.mubr.bf16.mxu0 0
    %71 = vmatmul.mubr.bf16.gmra.mrb[0].mxu0 %v33
    %v72 = vpop.f32.mrb[0].mxu0
    %v73 = vadd.f32 0.0, %v72
    %v74 = vpop.f32.mrb[0].mxu0
    %v75 = vpop.f32.mrb[0].mxu0
    %v76 = vadd.f32 0.0, %v75
    %v77 = vpop.f32.mrb[0].mxu0
    %78 = vmatprep.mubr.bf16.mxu0 0
    %79 = vmatmul.mubr.bf16.gmra.mrb[0].mxu0 %v36
    %v80 = vpop.f32.mrb[0].mxu0
    %v81 = vadd.f32 0.0, %v80
    %v82 = vpop.f32.mrb[0].mxu0
    %v83 = vpop.f32.mrb[0].mxu0
    %v84 = vpop.f32.mrb[0].mxu0
    %85 = vdwg.mxu0
    %v86 = vmul.f32 %v73, %v73
    %v87 = vmul.f32 %v76, %v76
    %v88 = vmul.f32 %v81, %v81
    %v89 = vld [vmem:[#allocation2] sm:$0xff]
    %v90 = vadd.f32 %v86, %v87
    %v91 = vadd.f32 %v90, %v88
    %v92 = vadd.f32 %v89, %v91
    %93 = vst [vmem:[#allocation2] sm:$0xff] %v92
    // Predicated region
    $region14: #{tpu_custom_call.1} parent=1 // pred_check
      _
    $region15: #{tpu_custom_call.1} parent=1 // pred_check_branch
      %95 = sbr.rel (0) target = $region17
    $region16: #{tpu_custom_call.1} parent=1 // pred_region
      %s97 = ssub.s32 128, 128
      %98 = vsyncadd [#allocation3], %s97
      %s100 = sshll.u32 [#allocation2], 4
      %s101 = int_to_ptr.vmem [resolvable:$true] %s100
      %103 = dma.vmem_to_hbm [thread:$0]  %s101, 128, %s2, [#allocation3]
    $region17: #{tpu_custom_call.1} parent=1 // pred_fallthru
      _
    // Predicated region
    $region18: #{tpu_custom_call.1} parent=1 // pred_check
      _
    $region19: #{tpu_custom_call.1} parent=1 // pred_check_branch
      %105 = sbr.rel (0) target = $region21
    $region20: #{tpu_custom_call.1} parent=1 // pred_region
      %106 = dma.done [#allocation3], 128
    $region21: #{tpu_custom_call.1} parent=1 // pred_fallthru
      _
    %107 = vsyncpa [#allocation3], 1

</llo_original>
